<compile_context>
chip_gen: v5e
topology: v5e:2x2
jax: 0.10.0
libtpu: 0.0.40
codegen_flags: <defaults>
</compile_context>

<pallas_src>
import functools
import math

import jax
import jax.numpy as jnp
from jax import lax
from jax.experimental import pallas as pl
from jax.experimental.pallas import tpu as pltpu

BN_EPS = 1e-5


def _round_up(x: int, m: int) -> int:
    return (x + m - 1) // m * m


def fc_bn_relu_kernel(x_ref, w_ref, gamma_ref, beta_ref, o_ref, acc_ref, *,
                      n_real: int):
    """One (m-tile, k-tile) grid step.

    x_ref:     (N_pad, tk)  mxu dtype   activations, K-slice k
    w_ref:     (tm,   tk)   mxu dtype   weight kept in (M, K) layout
    gamma_ref: (1, tm) f32, beta_ref: (1, tm) f32
    o_ref:     (N_pad, tm)  f32   output tile (resident across the K axis)
    acc_ref:   (N_pad, tm)  f32   VMEM accumulator scratch
    """
    k = pl.program_id(1)

    @pl.when(k == 0)
    def _init():
        acc_ref[...] = jnp.zeros_like(acc_ref)

    # acc += x_tile @ w_tile.T  (contract K on both operands -> (N_pad, tm)).
    acc_ref[...] += lax.dot_general(
        x_ref[...], w_ref[...],
        dimension_numbers=(((1,), (1,)), ((), ())),
        preferred_element_type=jnp.float32)

    @pl.when(k == pl.num_programs(1) - 1)
    def _finalize():
        y = acc_ref[...]
        # BatchNorm1d (training mode, biased variance) over the batch axis.
        # Single-pass stats: padded batch rows are all-zero, so dividing the
        # padded-row sums by the *real* batch size gives exact mean / E[y^2].
        inv_n = jnp.float32(1.0 / n_real)
        mean = jnp.sum(y, axis=0, keepdims=True) * inv_n          # (1, tm)
        ex2 = jnp.sum(y * y, axis=0, keepdims=True) * inv_n       # (1, tm)
        var = jnp.maximum(ex2 - mean * mean, 0.0)
        y_hat = (y - mean) * lax.rsqrt(var + BN_EPS)
        out = y_hat * gamma_ref[...] + beta_ref[...]
        o_ref[...] = jnp.maximum(out, 0.0).astype(o_ref.dtype)


def fc_bn_relu(x_nchw, weight_out_in, gamma, beta, *,
               tm=None, tk=512, mxu_dtype=jnp.bfloat16):
    """x_nchw: (N, C, H, W); weight_out_in: (M, K); gamma/beta: (M,)."""
    n = x_nchw.shape[0]
    x2d = x_nchw.reshape(n, -1).astype(jnp.float32)   # torch Flatten(start_dim=1)
    k = x2d.shape[1]
    m = weight_out_in.shape[0]

    # Lane/sublane friendly padded shapes: lane-dense output, >= 8 sublanes.
    n_pad = max(8, _round_up(n, 8))
    m_pad = _round_up(m, 128)
    tk = min(tk, _round_up(k, 128))
    k_pad = _round_up(k, tk)
    if tm is None:
        tm = 256 if (m_pad % 256 == 0) else 128
    tm = min(tm, m_pad)
    assert m_pad % tm == 0 and k_pad % tk == 0

    # Zero-pad (zero rows/cols contribute nothing to the matmul or BN sums).
    x_p = jnp.zeros((n_pad, k_pad), jnp.float32).at[:n, :k].set(x2d)
    w_p = jnp.zeros((m_pad, k_pad), jnp.float32).at[:m, :k].set(
        weight_out_in.astype(jnp.float32))
    g_p = jnp.zeros((1, m_pad), jnp.float32).at[0, :m].set(gamma)
    b_p = jnp.zeros((1, m_pad), jnp.float32).at[0, :m].set(beta)

    # MXU operands (bf16 by default); accumulation / BN stay f32 in-kernel.
    x_p = x_p.astype(mxu_dtype)
    w_p = w_p.astype(mxu_dtype)

    grid = (m_pad // tm, k_pad // tk)
    kernel = functools.partial(fc_bn_relu_kernel, n_real=n)

    cost = pl.CostEstimate(
        flops=2 * n_pad * k_pad * m_pad,
        transcendentals=0,
        bytes_accessed=(x_p.size * x_p.dtype.itemsize
                        + w_p.size * w_p.dtype.itemsize
                        + n_pad * m_pad * 4),
    )

    out_pad = pl.pallas_call(
        kernel,
        out_shape=jax.ShapeDtypeStruct((n_pad, m_pad), jnp.float32),
        grid=grid,
        in_specs=[
            pl.BlockSpec((n_pad, tk), lambda mi, ki: (0, ki)),   # x
            pl.BlockSpec((tm, tk), lambda mi, ki: (mi, ki)),     # w (M, K)
            pl.BlockSpec((1, tm), lambda mi, ki: (0, mi)),       # gamma
            pl.BlockSpec((1, tm), lambda mi, ki: (0, mi)),       # beta
        ],
        out_specs=pl.BlockSpec((n_pad, tm), lambda mi, ki: (0, mi)),
        scratch_shapes=[pltpu.VMEM((n_pad, tm), jnp.float32)],
        compiler_params=pltpu.CompilerParams(
            dimension_semantics=("parallel", "arbitrary")),
        cost_estimate=cost,
    )(x_p, w_p, g_p, b_p)

    return out_pad[:n, :m]


def reference(x_nchw, weight_out_in, gamma, beta, *, mxu_dtype=jnp.float32):
    """Pure-JAX FcBnRelu forward (optionally with bf16 matmul operands)."""
    n = x_nchw.shape[0]
    x2d = x_nchw.reshape(n, -1).astype(mxu_dtype)
    y = jnp.dot(x2d, weight_out_in.astype(mxu_dtype).T,
                preferred_element_type=jnp.float32)
    mean = jnp.mean(y, axis=0, keepdims=True)
    var = jnp.mean((y - mean) ** 2, axis=0, keepdims=True)
    y_hat = (y - mean) / jnp.sqrt(var + BN_EPS)
    return jnp.maximum(y_hat * gamma[None, :] + beta[None, :], 0.0)


if __name__ == "__main__":
    # Shapes consistent with the module: (N, C, H, W) flattened to
    # in_channels = C*H*W features, projected to out_channels.
    N, C, H, W = 2, 4, 16, 16
    in_channels = C * H * W          # 1024
    out_channels = 32

    key = jax.random.PRNGKey(0)
    kx, kw = jax.random.split(key)

    x = jax.random.normal(kx, (N, C, H, W), dtype=jnp.float32)

    bound = 1.0 / math.sqrt(in_channels)     # torch.nn.Linear default scale
    weight = jax.random.uniform(kw, (out_channels, in_channels),
                                dtype=jnp.float32, minval=-bound, maxval=bound)
    gamma = jnp.ones((out_channels,), dtype=jnp.float32)   # BN weight init
    beta = jnp.zeros((out_channels,), dtype=jnp.float32)   # BN bias init

    # Fast path: bf16 MXU operands, f32 accumulation + BN.
    out = jax.block_until_ready(fc_bn_relu(x, weight, gamma, beta))
    assert out.shape == (N, out_channels)
    ref_bf16 = reference(x, weight, gamma, beta, mxu_dtype=jnp.bfloat16)
    assert jnp.allclose(out, ref_bf16, atol=1e-3, rtol=1e-3), \
        "mismatch vs bf16-operand reference"

    # Full-precision path: validates tiling / BN / ReLU against the exact
    # f32 semantics of the PyTorch module.
    out_f32 = jax.block_until_ready(
        fc_bn_relu(x, weight, gamma, beta, mxu_dtype=jnp.float32))
    ref_f32 = reference(x, weight, gamma, beta, mxu_dtype=jnp.float32)
    assert jnp.allclose(out_f32, ref_f32, atol=1e-3, rtol=1e-3), \
        "mismatch vs f32 reference"

    print("KERNEL_OK")
</pallas_src>

<mosaic_0001>
module attributes {stable_mosaic.version = 11 : i64} {
  func.func @fc_bn_relu_kernel(%arg0: i32, %arg1: i32, %arg2: memref<8x512xbf16, #tpu.memory_space<vmem>>, %arg3: memref<128x512xbf16, #tpu.memory_space<vmem>>, %arg4: memref<1x128xf32, #tpu.memory_space<vmem>>, %arg5: memref<1x128xf32, #tpu.memory_space<vmem>>, %arg6: memref<8x128xf32, #tpu.memory_space<vmem>>, %arg7: memref<8x128xf32, #tpu.memory_space<vmem>>) attributes {dimension_semantics = [#tpu.dimension_semantics<parallel>, #tpu.dimension_semantics<arbitrary>], iteration_bounds = array<i64: 1, 2>, scalar_prefetch = 0 : i64, scratch_operands = 1 : i64, tpu.core_type = #tpu.core_type<tc>, window_params = [{transform_indices = @transform_0, window_bounds = array<i64: 8, 512>}, {transform_indices = @transform_1, window_bounds = array<i64: 128, 512>}, {transform_indices = @transform_2, window_bounds = array<i64: 1, 128>}, {transform_indices = @transform_3, window_bounds = array<i64: 1, 128>}, {transform_indices = @transform_4, window_bounds = array<i64: 8, 128>}]} {
    %c0_i32 = arith.constant 0 : i32
    %0 = arith.cmpi eq, %arg1, %c0_i32 : i32
    %1 = arith.extui %0 : i1 to i32
    %c0_i32_0 = arith.constant 0 : i32
    %2 = arith.cmpi ne, %1, %c0_i32_0 : i32
    scf.if %2 {
      %cst_9 = arith.constant 0.000000e+00 : f32
      %12 = vector.broadcast %cst_9 : f32 to vector<8x128xf32>
      %c0_10 = arith.constant 0 : index
      %c0_11 = arith.constant 0 : index
      %13 = vector.load %arg7[%c0_10, %c0_11] : memref<8x128xf32, #tpu.memory_space<vmem>>, vector<8x128xf32>
      tpu.vector_store %arg7[%c0_10, %c0_11], %12 {strides = array<i32>} : memref<8x128xf32, #tpu.memory_space<vmem>>, vector<8x128xf32>,
    } else {
    }
    %c0 = arith.constant 0 : index
    %c0_1 = arith.constant 0 : index
    %3 = vector.load %arg7[%c0, %c0_1] : memref<8x128xf32, #tpu.memory_space<vmem>>, vector<8x128xf32>
    %c0_2 = arith.constant 0 : index
    %c0_3 = arith.constant 0 : index
    %4 = vector.load %arg2[%c0_2, %c0_3] : memref<8x512xbf16, #tpu.memory_space<vmem>>, vector<8x512xbf16>
    %c0_4 = arith.constant 0 : index
    %c0_5 = arith.constant 0 : index
    %5 = vector.load %arg3[%c0_4, %c0_5] : memref<128x512xbf16, #tpu.memory_space<vmem>>, vector<128x512xbf16>
    %cst = arith.constant dense<0.000000e+00> : vector<8x128xf32>
    %6 = tpu.matmul %4, %5, %cst {dimension_numbers = #tpu.dot_dimension_numbers<[1], [1], [0], [0], [0, 0, 1, 0], [], []>} : vector<8x512xbf16>, vector<128x512xbf16>, vector<8x128xf32> -> vector<8x128xf32>
    %7 = arith.addf %3, %6 : vector<8x128xf32>
    %c0_6 = arith.constant 0 : index
    %c0_7 = arith.constant 0 : index
    %8 = vector.load %arg7[%c0_6, %c0_7] : memref<8x128xf32, #tpu.memory_space<vmem>>, vector<8x128xf32>
    tpu.vector_store %arg7[%c0_6, %c0_7], %7 {strides = array<i32>} : memref<8x128xf32, #tpu.memory_space<vmem>>, vector<8x128xf32>,
    %c1_i32 = arith.constant 1 : i32
    %9 = arith.cmpi eq, %arg1, %c1_i32 : i32
    %10 = arith.extui %9 : i1 to i32
    %c0_i32_8 = arith.constant 0 : i32
    %11 = arith.cmpi ne, %10, %c0_i32_8 : i32
    scf.if %11 {
      %c0_9 = arith.constant 0 : index
      %c0_10 = arith.constant 0 : index
      %12 = vector.load %arg7[%c0_9, %c0_10] : memref<8x128xf32, #tpu.memory_space<vmem>>, vector<8x128xf32>
      %cst_11 = arith.constant dense<0.000000e+00> : vector<128xf32>
      %13 = vector.multi_reduction <add>, %12, %cst_11 [0] : vector<8x128xf32> to vector<128xf32>
      %14 = vector.shape_cast %13 : vector<128xf32> to vector<1x128xf32>
      %cst_12 = arith.constant 5.000000e-01 : f32
      %15 = vector.broadcast %cst_12 : f32 to vector<1x128xf32>
      %16 = arith.mulf %14, %15 : vector<1x128xf32>
      %17 = arith.mulf %12, %12 : vector<8x128xf32>
      %cst_13 = arith.constant dense<0.000000e+00> : vector<128xf32>
      %18 = vector.multi_reduction <add>, %17, %cst_13 [0] : vector<8x128xf32> to vector<128xf32>
      %19 = vector.shape_cast %18 : vector<128xf32> to vector<1x128xf32>
      %cst_14 = arith.constant 5.000000e-01 : f32
      %20 = vector.broadcast %cst_14 : f32 to vector<1x128xf32>
      %21 = arith.mulf %19, %20 : vector<1x128xf32>
      %22 = arith.mulf %16, %16 : vector<1x128xf32>
      %23 = arith.subf %21, %22 : vector<1x128xf32>
      %cst_15 = arith.constant 0.000000e+00 : f32
      %24 = vector.broadcast %cst_15 : f32 to vector<1x128xf32>
      %25 = arith.maximumf %23, %24 : vector<1x128xf32>
      %26 = vector.broadcast %16 : vector<1x128xf32> to vector<8x128xf32>
      %27 = arith.subf %12, %26 : vector<8x128xf32>
      %cst_16 = arith.constant 9.99999974E-6 : f32
      %28 = vector.broadcast %cst_16 : f32 to vector<1x128xf32>
      %29 = arith.addf %25, %28 : vector<1x128xf32>
      %30 = math.rsqrt %29 : vector<1x128xf32>
      %31 = vector.broadcast %30 : vector<1x128xf32> to vector<8x128xf32>
      %32 = arith.mulf %27, %31 : vector<8x128xf32>
      %c0_17 = arith.constant 0 : index
      %c0_18 = arith.constant 0 : index
      %33 = vector.load %arg4[%c0_17, %c0_18] : memref<1x128xf32, #tpu.memory_space<vmem>>, vector<1x128xf32>
      %34 = vector.broadcast %33 : vector<1x128xf32> to vector<8x128xf32>
      %35 = arith.mulf %32, %34 : vector<8x128xf32>
      %c0_19 = arith.constant 0 : index
      %c0_20 = arith.constant 0 : index
      %36 = vector.load %arg5[%c0_19, %c0_20] : memref<1x128xf32, #tpu.memory_space<vmem>>, vector<1x128xf32>
      %37 = vector.broadcast %36 : vector<1x128xf32> to vector<8x128xf32>
      %38 = arith.addf %35, %37 : vector<8x128xf32>
      %cst_21 = arith.constant 0.000000e+00 : f32
      %39 = vector.broadcast %cst_21 : f32 to vector<8x128xf32>
      %40 = arith.maximumf %38, %39 : vector<8x128xf32>
      %c0_22 = arith.constant 0 : index
      %c0_23 = arith.constant 0 : index
      %41 = vector.load %arg6[%c0_22, %c0_23] : memref<8x128xf32, #tpu.memory_space<vmem>>, vector<8x128xf32>
      tpu.vector_store %arg6[%c0_22, %c0_23], %40 {strides = array<i32>} : memref<8x128xf32, #tpu.memory_space<vmem>>, vector<8x128xf32>,
    } else {
    }
    return
  }
  func.func @transform_0(%arg0: i32, %arg1: i32) -> (i32, i32) {
    %c0_i32 = arith.constant 0 : i32
    %c0_i32_0 = arith.constant 0 : i32
    return %c0_i32, %arg1 : i32, i32
  }
  func.func @transform_1(%arg0: i32, %arg1: i32) -> (i32, i32) {
    %c0_i32 = arith.constant 0 : i32
    return %arg0, %arg1 : i32, i32
  }
  func.func @transform_2(%arg0: i32, %arg1: i32) -> (i32, i32) {
    %c0_i32 = arith.constant 0 : i32
    %c0_i32_0 = arith.constant 0 : i32
    return %c0_i32, %arg0 : i32, i32
  }
  func.func @transform_3(%arg0: i32, %arg1: i32) -> (i32, i32) {
    %c0_i32 = arith.constant 0 : i32
    %c0_i32_0 = arith.constant 0 : i32
    return %c0_i32, %arg0 : i32, i32
  }
  func.func @transform_4(%arg0: i32, %arg1: i32) -> (i32, i32) {
    %c0_i32 = arith.constant 0 : i32
    %c0_i32_0 = arith.constant 0 : i32
    return %c0_i32, %arg0 : i32, i32
  }
}

</mosaic_0001>

<llo_original>
// kernel: tpu_custom_call.1
$region0: #{tpu_custom_call.1}
  #allocation0 [shape = 'u32[]', space=smem, size = 0x4, offset = 0x4, fixed_abs, tag = 'smem constant byte address 0x4 - core index']
  #allocation1 [shape = 'u32[72,128]{1,0:T(1,128)}', space=vmem, size = 0x9000, scoped, tag = 'internal scratch']
  #allocation2 [shape = 'f32[8,128]{1,0:T(8,128)}', space=vmem, size = 0x1000, scoped, tag = 'scratch operand']
  %s0 = inlined_call_operand.hbm [shape: bf16[8,1024], index: 0, kind: input, shape index: {}]
  %s1 = inlined_call_operand.hbm [shape: bf16[128,1024], index: 1, kind: input, shape index: {}]
  %s2 = inlined_call_operand.vmem [shape: f32[1,128], index: 2, kind: input, shape index: {}]
  %s3 = inlined_call_operand.vmem [shape: f32[1,128], index: 3, kind: input, shape index: {}]
  %s4 = inlined_call_operand.hbm [shape: f32[8,128], index: 4, kind: output, shape index: {}]
  %s5 = sld [smem:[#allocation0]]
  $region65: #{tpu_custom_call.1} parent=0
    _
  %s7 = ssub.s32 1, %s5
  %s8 = scalar_select 0, %s7, %s5
  $region1: #{tpu_custom_call.1} parent=0
    #allocation3 [shape = 'u8[16384]{0}', space=vmem, size = 0x4000, scoped, tag = 'input window, operand 0']
    #allocation4 [shape = 's32[2]{0}', space=sflag, size = 0x8, scoped, tag = 'scoped memory for tpu_custom_call.1']
    #allocation5 [shape = 's32[2]{0}', space=sflag, size = 0x8, scoped, tag = 'scoped memory for tpu_custom_call.1']
    #allocation6 [shape = 'u8[262144]{0}', space=vmem, size = 0x40000, scoped, tag = 'input window, operand 1']
    #allocation7 [shape = 's32[2]{0}', space=sflag, size = 0x8, scoped, tag = 'scoped memory for tpu_custom_call.1']
    #allocation8 [shape = 'u8[4096]{0}', space=vmem, size = 0x1000, scoped, tag = 'output window, operand 0, single buffered']
    %9 = vsyncpa [#allocation4], 0
    %s10 = scalar_lea.sflag [#allocation4], 1
    %11 = vsyncpa %s10, 0
    %12 = vsyncpa [#allocation7], 0
    %s13 = scalar_lea.sflag [#allocation7], 1
    %14 = vsyncpa %s13, 0
    %15 = vsyncpa [#allocation5], 0
    loop: start=0, step=1, limit=4
    $region2: #{tpu_custom_call.1} parent=1 // loop_pre_header
      _
    $region3: #{tpu_custom_call.1} parent=1 // loop_header
      %s17 = sphi 0, %s21
      %p18 = scmp.ge.s32.totalorder %s17, 4
      %s24 = sphi 0, %s36
      %s25 = sphi 0, %s32
      %s26 = sphi 0, %s24
      %s27 = sphi 0, %s25
      %s28 = sphi 0, %s26
      %s29 = sphi 0, %s27
      %s39 = sphi 0, %s41
      %s42 = sphi 0, %s39
      %s43 = sphi 0, %s42
      %s59 = sphi 0, %s43
      %s67 = sphi 0, %s69
      %s70 = sphi 0, %s67
      %s71 = sphi 0, %s70
      %s87 = sphi 0, %s71
      %s93 = sphi 0, %s95
      %s96 = sphi 0, %s93
      %s97 = sphi 0, %s96
      %s113 = sphi 0, %s97
      %s119 = sphi 0, %s121
      %s122 = sphi 0, %s119
      %s123 = sphi 0, %s122
      %s139 = sphi 0, %s123
      %s145 = sphi 0, %s147
      %s148 = sphi 0, %s145
      %s149 = sphi 0, %s148
      %s165 = sphi 0, %s149
    $region4: #{tpu_custom_call.1} parent=1 // loop_header_branch
      %20 = sbr.rel (%p18) target = $region8
    $region5: #{tpu_custom_call.1} parent=1 // loop_body
      %s22 = ssub.s32 %s17, 1
      %s23 = ssub.s32 %s17, 2
      %s30 = sadd.s32 1, %s25
      %p31 = scmp.ge.s32.totalorder %s30, 2
      %s32 = scalar_select %p31, 0, %s30
      %s33 = sadd.s32 1, %s24
      %s34 = scalar_select %p31, %s33, %s24
      %p35 = scmp.ge.s32.totalorder %s34, 1
      %s36 = scalar_select %p35, 0, %s34
      %s37 = ssub.s32 %s25, %s32
      %p38 = scmp.eq.s32.totalorder %s37, 0
      %s40 = sadd.s32 %s39, 1
      %s41 = scalar_select %p38, %s39, %s40
      %p44 = pneg %p38
      %p45 = scmp.eq.s32.totalorder %s17, 1
      %p46 = por %p44, %p45
      %p47 = scmp.ne.s32.totalorder %s39, %s42
      %p48 = scmp.eq.s32.totalorder %s17, 0
      %p49 = por %p47, %p48
      %p50 = scmp.ne.s32.totalorder %s39, %s42
      %p51 = scmp.eq.s32.totalorder %s22, 1
      %p52 = por %p50, %p51
      %p53 = scmp.ne.s32.totalorder %s42, %s43
      %p54 = scmp.eq.s32.totalorder %s22, 0
      %p55 = por %p53, %p54
      %p56 = scmp.ne.s32.totalorder %s42, %s43
      %p57 = scmp.eq.s32.totalorder %s23, 1
      %p58 = por %p56, %p57
      %p60 = scmp.ne.s32.totalorder %s43, %s59
      %p61 = scmp.eq.s32.totalorder %s23, 0
      %p62 = por %p60, %p61
      %s63 = ssub.s32 %s24, %s36
      %s64 = ssub.s32 %s25, %s32
      %s65 = sor.u32 %s63, %s64
      %p66 = scmp.eq.s32.totalorder %s65, 0
      %s68 = sadd.s32 %s67, 1
      %s69 = scalar_select %p66, %s67, %s68
      %p72 = pneg %p66
      %p73 = scmp.eq.s32.totalorder %s17, 1
      %p74 = por %p72, %p73
      %p75 = scmp.ne.s32.totalorder %s67, %s70
      %p76 = scmp.eq.s32.totalorder %s17, 0
      %p77 = por %p75, %p76
      %p78 = scmp.ne.s32.totalorder %s67, %s70
      %p79 = scmp.eq.s32.totalorder %s22, 1
      %p80 = por %p78, %p79
      %p81 = scmp.ne.s32.totalorder %s70, %s71
      %p82 = scmp.eq.s32.totalorder %s22, 0
      %p83 = por %p81, %p82
      %p84 = scmp.ne.s32.totalorder %s70, %s71
      %p85 = scmp.eq.s32.totalorder %s23, 1
      %p86 = por %p84, %p85
      %p88 = scmp.ne.s32.totalorder %s71, %s87
      %p89 = scmp.eq.s32.totalorder %s23, 0
      %p90 = por %p88, %p89
      %s91 = ssub.s32 %s24, %s36
      %p92 = scmp.eq.s32.totalorder %s91, 0
      %s94 = sadd.s32 %s93, 1
      %s95 = scalar_select %p92, %s93, %s94
      %p98 = pneg %p92
      %p99 = scmp.eq.s32.totalorder %s17, 1
      %p100 = por %p98, %p99
      %p101 = scmp.ne.s32.totalorder %s93, %s96
      %p102 = scmp.eq.s32.totalorder %s17, 0
      %p103 = por %p101, %p102
      %p104 = scmp.ne.s32.totalorder %s93, %s96
      %p105 = scmp.eq.s32.totalorder %s22, 1
      %p106 = por %p104, %p105
      %p107 = scmp.ne.s32.totalorder %s96, %s97
      %p108 = scmp.eq.s32.totalorder %s22, 0
      %p109 = por %p107, %p108
      %p110 = scmp.ne.s32.totalorder %s96, %s97
      %p111 = scmp.eq.s32.totalorder %s23, 1
      %p112 = por %p110, %p111
      %p114 = scmp.ne.s32.totalorder %s97, %s113
      %p115 = scmp.eq.s32.totalorder %s23, 0
      %p116 = por %p114, %p115
      %s117 = ssub.s32 %s24, %s36
      %p118 = scmp.eq.s32.totalorder %s117, 0
      %s120 = sadd.s32 %s119, 1
      %s121 = scalar_select %p118, %s119, %s120
      %p124 = pneg %p118
      %p125 = scmp.eq.s32.totalorder %s17, 1
      %p126 = por %p124, %p125
      %p127 = scmp.ne.s32.totalorder %s119, %s122
      %p128 = scmp.eq.s32.totalorder %s17, 0
      %p129 = por %p127, %p128
      %p130 = scmp.ne.s32.totalorder %s119, %s122
      %p131 = scmp.eq.s32.totalorder %s22, 1
      %p132 = por %p130, %p131
      %p133 = scmp.ne.s32.totalorder %s122, %s123
      %p134 = scmp.eq.s32.totalorder %s22, 0
      %p135 = por %p133, %p134
      %p136 = scmp.ne.s32.totalorder %s122, %s123
      %p137 = scmp.eq.s32.totalorder %s23, 1
      %p138 = por %p136, %p137
      %p140 = scmp.ne.s32.totalorder %s123, %s139
      %p141 = scmp.eq.s32.totalorder %s23, 0
      %p142 = por %p140, %p141
      %s143 = ssub.s32 %s24, %s36
      %p144 = scmp.eq.s32.totalorder %s143, 0
      %s146 = sadd.s32 %s145, 1
      %s147 = scalar_select %p144, %s145, %s146
      %p150 = pneg %p144
      %p151 = scmp.eq.s32.totalorder %s17, 1
      %p152 = por %p150, %p151
      %p153 = scmp.ne.s32.totalorder %s145, %s148
      %p154 = scmp.eq.s32.totalorder %s17, 0
      %p155 = por %p153, %p154
      %p156 = scmp.ne.s32.totalorder %s145, %s148
      %p157 = scmp.eq.s32.totalorder %s22, 1
      %p158 = por %p156, %p157
      %p159 = scmp.ne.s32.totalorder %s148, %s149
      %p160 = scmp.eq.s32.totalorder %s22, 0
      %p161 = por %p159, %p160
      %p162 = scmp.ne.s32.totalorder %s148, %s149
      %p163 = scmp.eq.s32.totalorder %s23, 1
      %p164 = por %p162, %p163
      %p166 = scmp.ne.s32.totalorder %s149, %s165
      %p167 = scmp.eq.s32.totalorder %s23, 0
      %p168 = por %p166, %p167
      %p169 = scmp.le.s32.totalorder 1, %s17
      %p170 = scmp.lt.s32.totalorder %s17, 3
      %p171 = pnand %p169, %p170
      %p172 = pneg %p171
      // Predicated region
      $region9: #{tpu_custom_call.1} parent=5 // pred_check
        _
      $region10: #{tpu_custom_call.1} parent=5 // pred_check_branch
        %174 = sbr.rel (%p171) target = $region12
      $region11: #{tpu_custom_call.1} parent=5 // pred_region
        %s175 = ssub.s32 %s17, 1
        // Predicated region
        $region13: #{tpu_custom_call.1} parent=11 // pred_check
          %p176 = pneg %p109
        $region14: #{tpu_custom_call.1} parent=11 // pred_check_branch
          %178 = sbr.rel (%p176) target = $region16
        $region15: #{tpu_custom_call.1} parent=11 // pred_region
          %p179 = scmp.lt.s32.totalorder %s26, 0
          %s180 = scalar_select %p179, %s26, 0
          %s181 = scalar_lea.vmem %s2, %s180
        $region16: #{tpu_custom_call.1} parent=11 // pred_fallthru
          _
        // Predicated region
        $region17: #{tpu_custom_call.1} parent=11 // pred_check
          %p182 = pneg %p135
        $region18: #{tpu_custom_call.1} parent=11 // pred_check_branch
          %184 = sbr.rel (%p182) target = $region20
        $region19: #{tpu_custom_call.1} parent=11 // pred_region
          %p185 = scmp.lt.s32.totalorder %s26, 0
          %s186 = scalar_select %p185, %s26, 0
          %s187 = scalar_lea.vmem %s3, %s186
        $region20: #{tpu_custom_call.1} parent=11 // pred_fallthru
          _
      $region12: #{tpu_custom_call.1} parent=5 // pred_fallthru
        _
      %p188 = scmp.lt.s32.totalorder %s17, 2
      // Predicated region
      $region21: #{tpu_custom_call.1} parent=5 // pred_check
        %p189 = pneg %p188
      $region22: #{tpu_custom_call.1} parent=5 // pred_check_branch
        %191 = sbr.rel (%p189) target = $region24
      $region23: #{tpu_custom_call.1} parent=5 // pred_region
        // Predicated region
        $region25: #{tpu_custom_call.1} parent=23 // pred_check
          %p192 = pneg %p49
        $region26: #{tpu_custom_call.1} parent=23 // pred_check_branch
          %194 = sbr.rel (%p192) target = $region28
        $region27: #{tpu_custom_call.1} parent=23 // pred_region
          %s195 = sand.u32 %s39, 1
          %s196 = scalar_lea.sflag [#allocation4], %s195
          %s197 = sand.u32 %s39, 1
          %s198 = smul.addr %s197, 16
          %s199 = scalar_lea.vmem [#allocation3], %s198
          %s200 = smul.u32 4, %s25
          %202 = vsyncadd %s196, 0
          %s203 = smul.addr %s200, 4
          %s204 = scalar_lea.hbm %s0, %s203
          %s206 = sshll.u32 %s204, 4
          %s207 = int_to_ptr.hbm [resolvable:$true] %s206
          %s208 = sshll.u32 %s199, 4
          %s209 = int_to_ptr.vmem [resolvable:$true] %s208
          %211 = dma.hbm_to_vmem [thread:$0]  %s207, 256, %s209, %s196
        $region28: #{tpu_custom_call.1} parent=23 // pred_fallthru
          _
        // Predicated region
        $region29: #{tpu_custom_call.1} parent=23 // pred_check
          %p212 = pneg %p77
        $region30: #{tpu_custom_call.1} parent=23 // pred_check_branch
          %214 = sbr.rel (%p212) target = $region32
        $region31: #{tpu_custom_call.1} parent=23 // pred_region
          %s215 = sand.u32 %s67, 1
          %s216 = scalar_lea.sflag [#allocation7], %s215
          %s217 = sand.u32 %s67, 1
          %s218 = smul.addr %s217, 256
          %s219 = scalar_lea.vmem [#allocation6], %s218
          %s220 = smul.u32 16, %s24
          %s221 = smul.u32 4, %s25
          %223 = vsyncadd %s216, 0
          %s224 = smul.addr %s220, 8
          %s225 = sadd.s32 %s221, %s224
          %s226 = smul.addr %s225, 4
          %s227 = scalar_lea.hbm %s1, %s226
          %s228 = sshll.u32 %s227, 4
          %s229 = int_to_ptr.hbm [resolvable:$true] %s228
          %s230 = sshll.u32 %s219, 4
          %s231 = int_to_ptr.vmem [resolvable:$true] %s230
          %236 = dma.hbm_to_vmem [thread:$0]  %s229, 4096, %s231, %s216, 512, 256, 16
        $region32: #{tpu_custom_call.1} parent=23 // pred_fallthru
          _
      $region24: #{tpu_custom_call.1} parent=5 // pred_fallthru
        _
      %p237 = scmp.le.s32.totalorder 1, %s17
      %p238 = scmp.lt.s32.totalorder %s17, 3
      %p239 = pnand %p237, %p238
      %p240 = pneg %p239
      // Predicated region
      $region33: #{tpu_custom_call.1} parent=5 // pred_check
        _
      $region34: #{tpu_custom_call.1} parent=5 // pred_check_branch
        %242 = sbr.rel (%p239) target = $region36
      $region35: #{tpu_custom_call.1} parent=5 // pred_region
        %s243 = ssub.s32 %s17, 1
        %s244 = sand.u32 %s42, 1
        %s245 = scalar_lea.sflag [#allocation4], %s244
        %s246 = sand.u32 %s42, 1
        %s247 = smul.addr %s246, 16
        %s248 = scalar_lea.vmem [#allocation3], %s247
        // Predicated region
        $region37: #{tpu_custom_call.1} parent=35 // pred_check
          %p249 = pneg %p55
        $region38: #{tpu_custom_call.1} parent=35 // pred_check_branch
          %251 = sbr.rel (%p249) target = $region40
        $region39: #{tpu_custom_call.1} parent=35 // pred_region
          %253 = dma.done %s245, 256
        $region40: #{tpu_custom_call.1} parent=35 // pred_fallthru
          _
        %s254 = sand.u32 %s70, 1
        %s255 = scalar_lea.sflag [#allocation7], %s254
        %s256 = sand.u32 %s70, 1
        %s257 = smul.addr %s256, 256
        %s258 = scalar_lea.vmem [#allocation6], %s257
        // Predicated region
        $region41: #{tpu_custom_call.1} parent=35 // pred_check
          %p259 = pneg %p83
        $region42: #{tpu_custom_call.1} parent=35 // pred_check_branch
          %261 = sbr.rel (%p259) target = $region44
        $region43: #{tpu_custom_call.1} parent=35 // pred_region
          %263 = dma.done %s255, 4096
        $region44: #{tpu_custom_call.1} parent=35 // pred_fallthru
          _
        %s264 = sand.u32 %s42, 1
        %s265 = scalar_lea.sflag [#allocation4], %s264
        %s266 = sand.u32 %s42, 1
        %s267 = smul.addr %s266, 16
        %s268 = scalar_lea.vmem [#allocation3], %s267
        %p269 = pneg %p55
        %p270 = pneg %p52
        %s271 = sand.u32 %s70, 1
        %s272 = scalar_lea.sflag [#allocation7], %s271
        %s273 = sand.u32 %s70, 1
        %s274 = smul.addr %s273, 256
        %s275 = scalar_lea.vmem [#allocation6], %s274
        %p276 = pneg %p83
        %p277 = pneg %p80
        %p278 = scmp.lt.s32.totalorder %s26, 0
        %s279 = scalar_select %p278, %s26, 0
        %s280 = scalar_lea.vmem %s2, %s279
        %p281 = pneg %p109
        %p282 = pneg %p106
        %p283 = scmp.lt.s32.totalorder %s26, 0
        %s284 = scalar_select %p283, %s26, 0
        %s285 = scalar_lea.vmem %s3, %s284
        %p286 = pneg %p135
        %p287 = pneg %p132
        %p288 = pneg %p161
        %p289 = pneg %p158
        %s290 = smul.u32 4, %s27
        %s291 = smul.u32 16, %s26
        %s292 = smul.u32 4, %s27
        %p293 = scmp.lt.s32.totalorder %s26, 0
        %s294 = scalar_select %p293, %s26, 0
        %s295 = scalar_lea.vmem %s2, %s294
        %p296 = scmp.lt.s32.totalorder %s26, 0
        %s297 = scalar_select %p296, %s26, 0
        %s298 = scalar_lea.vmem %s3, %s297
        %p299 = scmp.eq.s32.totalorder %s27, 0
        // Predicated region
        $region45: #{tpu_custom_call.1} parent=35 // pred_check
          %p300 = pneg %p299
        $region46: #{tpu_custom_call.1} parent=35 // pred_check_branch
          %302 = sbr.rel (%p300) target = $region48
        $region47: #{tpu_custom_call.1} parent=35 // pred_region
          %303 = vst [vmem:[#allocation2] sm:$0xff] 0.0
        $region48: #{tpu_custom_call.1} parent=35 // pred_fallthru
          _
        %v304 = vld [vmem:[#allocation2] sm:$0xff]
        %v305 = vld [vmem:[%s248] sm:$0xff]
        %v306 = vld [vmem:[%s248 + $0x8] sm:$0xff]
        %v307 = vld [vmem:[%s258] sm:$0xff]
        %v308 = vld [vmem:[%s258 + $0x8] sm:$0xff]
        %v309 = vld [vmem:[%s258 + $0x10] sm:$0xff]
        %v310 = vld [vmem:[%s258 + $0x18] sm:$0xff]
        %v311 = vld [vmem:[%s258 + $0x20] sm:$0xff]
        %v312 = vld [vmem:[%s258 + $0x28] sm:$0xff]
        %v313 = vld [vmem:[%s258 + $0x30] sm:$0xff]
        %v314 = vld [vmem:[%s258 + $0x38] sm:$0xff]
        %v315 = vld [vmem:[%s258 + $0x40] sm:$0xff]
        %v316 = vld [vmem:[%s258 + $0x48] sm:$0xff]
        %v317 = vld [vmem:[%s258 + $0x50] sm:$0xff]
        %v318 = vld [vmem:[%s258 + $0x58] sm:$0xff]
        %v319 = vld [vmem:[%s258 + $0x60] sm:$0xff]
        %v320 = vld [vmem:[%s258 + $0x68] sm:$0xff]
        %v321 = vld [vmem:[%s258 + $0x70] sm:$0xff]
        %v322 = vld [vmem:[%s258 + $0x78] sm:$0xff]
        %v323 = vld [vmem:[%s258 + $0x80] sm:$0xff]
        %v324 = vld [vmem:[%s258 + $0x88] sm:$0xff]
        %v325 = vld [vmem:[%s258 + $0x90] sm:$0xff]
        %v326 = vld [vmem:[%s258 + $0x98] sm:$0xff]
        %v327 = vld [vmem:[%s258 + $0xa0] sm:$0xff]
        %v328 = vld [vmem:[%s258 + $0xa8] sm:$0xff]
        %v329 = vld [vmem:[%s258 + $0xb0] sm:$0xff]
        %v330 = vld [vmem:[%s258 + $0xb8] sm:$0xff]
        %v331 = vld [vmem:[%s258 + $0xc0] sm:$0xff]
        %v332 = vld [vmem:[%s258 + $0xc8] sm:$0xff]
        %v333 = vld [vmem:[%s258 + $0xd0] sm:$0xff]
        %v334 = vld [vmem:[%s258 + $0xd8] sm:$0xff]
        %v335 = vld [vmem:[%s258 + $0xe0] sm:$0xff]
        %v336 = vld [vmem:[%s258 + $0xe8] sm:$0xff]
        %v337 = vld [vmem:[%s258 + $0xf0] sm:$0xff]
        %v338 = vld [vmem:[%s258 + $0xf8] sm:$0xff]
        %v341 = vunpack.c.l.b16 %v305
        %v342 = vunpack.c.h.b16 %v305
        %v343 = vunpack.c.l.b16 %v306
        %v344 = vunpack.c.h.b16 %v306
        %v345 = vpack.c.b16 %v341, %v341
        %v346 = vpack.c.b16 %v342, %v342
        %v347 = vpack.c.b16 %v343, %v343
        %v348 = vpack.c.b16 %v344, %v344
        %v385 = vunpack.c.l.b16 %v307
        %v386 = vunpack.c.h.b16 %v307
        %v387 = vunpack.c.l.b16 %v308
        %v388 = vunpack.c.h.b16 %v308
        %v389 = vunpack.c.l.b16 %v309
        %v390 = vunpack.c.h.b16 %v309
        %v391 = vunpack.c.l.b16 %v310
        %v392 = vunpack.c.h.b16 %v310
        %v393 = vunpack.c.l.b16 %v311
        %v394 = vunpack.c.h.b16 %v311
        %v395 = vunpack.c.l.b16 %v312
        %v396 = vunpack.c.h.b16 %v312
        %v397 = vunpack.c.l.b16 %v313
        %v398 = vunpack.c.h.b16 %v313
        %v399 = vunpack.c.l.b16 %v314
        %v400 = vunpack.c.h.b16 %v314
        %v401 = vunpack.c.l.b16 %v315
        %v402 = vunpack.c.h.b16 %v315
        %v403 = vunpack.c.l.b16 %v316
        %v404 = vunpack.c.h.b16 %v316
        %v405 = vunpack.c.l.b16 %v317
        %v406 = vunpack.c.h.b16 %v317
        %v407 = vunpack.c.l.b16 %v318
        %v408 = vunpack.c.h.b16 %v318
        %v409 = vunpack.c.l.b16 %v319
        %v410 = vunpack.c.h.b16 %v319
        %v411 = vunpack.c.l.b16 %v320
        %v412 = vunpack.c.h.b16 %v320
        %v413 = vunpack.c.l.b16 %v321
        %v414 = vunpack.c.h.b16 %v321
        %v415 = vunpack.c.l.b16 %v322
        %v416 = vunpack.c.h.b16 %v322
        %v417 = vunpack.c.l.b16 %v323
        %v418 = vunpack.c.h.b16 %v323
        %v419 = vunpack.c.l.b16 %v324
        %v420 = vunpack.c.h.b16 %v324
        %v421 = vunpack.c.l.b16 %v325
        %v422 = vunpack.c.h.b16 %v325
        %v423 = vunpack.c.l.b16 %v326
        %v424 = vunpack.c.h.b16 %v326
        %v425 = vunpack.c.l.b16 %v327
        %v426 = vunpack.c.h.b16 %v327
        %v427 = vunpack.c.l.b16 %v328
        %v428 = vunpack.c.h.b16 %v328
        %v429 = vunpack.c.l.b16 %v329
        %v430 = vunpack.c.h.b16 %v329
        %v431 = vunpack.c.l.b16 %v330
        %v432 = vunpack.c.h.b16 %v330
        %v433 = vunpack.c.l.b16 %v331
        %v434 = vunpack.c.h.b16 %v331
        %v435 = vunpack.c.l.b16 %v332
        %v436 = vunpack.c.h.b16 %v332
        %v437 = vunpack.c.l.b16 %v333
        %v438 = vunpack.c.h.b16 %v333
        %v439 = vunpack.c.l.b16 %v334
        %v440 = vunpack.c.h.b16 %v334
        %v441 = vunpack.c.l.b16 %v335
        %v442 = vunpack.c.h.b16 %v335
        %v443 = vunpack.c.l.b16 %v336
        %v444 = vunpack.c.h.b16 %v336
        %v445 = vunpack.c.l.b16 %v337
        %v446 = vunpack.c.h.b16 %v337
        %v447 = vunpack.c.l.b16 %v338
        %v448 = vunpack.c.h.b16 %v338
        %v449 = vpack.c.b16 %v389, %v385
        %v450 = vpack.c.b16 %v390, %v386
        %v451 = vpack.c.b16 %v391, %v387
        %v452 = vpack.c.b16 %v392, %v388
        %v453 = vpack.c.b16 %v397, %v393
        %v454 = vpack.c.b16 %v398, %v394
        %v455 = vpack.c.b16 %v399, %v395
        %v456 = vpack.c.b16 %v400, %v396
        %v457 = vpack.c.b16 %v405, %v401
        %v458 = vpack.c.b16 %v406, %v402
        %v459 = vpack.c.b16 %v407, %v403
        %v460 = vpack.c.b16 %v408, %v404
        %v461 = vpack.c.b16 %v413, %v409
        %v462 = vpack.c.b16 %v414, %v410
        %v463 = vpack.c.b16 %v415, %v411
        %v464 = vpack.c.b16 %v416, %v412
        %v465 = vpack.c.b16 %v421, %v417
        %v466 = vpack.c.b16 %v422, %v418
        %v467 = vpack.c.b16 %v423, %v419
        %v468 = vpack.c.b16 %v424, %v420
        %v469 = vpack.c.b16 %v429, %v425
        %v470 = vpack.c.b16 %v430, %v426
        %v471 = vpack.c.b16 %v431, %v427
        %v472 = vpack.c.b16 %v432, %v428
        %v473 = vpack.c.b16 %v437, %v433
        %v474 = vpack.c.b16 %v438, %v434
        %v475 = vpack.c.b16 %v439, %v435
        %v476 = vpack.c.b16 %v440, %v436
        %v477 = vpack.c.b16 %v445, %v441
        %v478 = vpack.c.b16 %v446, %v442
        %v479 = vpack.c.b16 %v447, %v443
        %v480 = vpack.c.b16 %v448, %v444
        %513 = vmatpush.bf16.xpose.msra.mxu0 %v477
        %514 = vmatpush.bf16.xpose.msra.mxu0 %v473
        %515 = vmatpush.bf16.xpose.msra.mxu0 %v469
        %516 = vmatpush.bf16.xpose.msra.mxu0 %v465
        %517 = vmatpush.bf16.xpose.msra.mxu0 %v461
        %518 = vmatpush.bf16.xpose.msra.mxu0 %v457
        %519 = vmatpush.bf16.xpose.msra.mxu0 %v453
        %520 = vmatpush.bf16.xpose.msra.mxu0 %v449
        %521 = vmatmul.bf16.gmra.mxu0 %v345
        %v522 = vpop.f32.mrf.mxu0
        %v523 = vadd.f32 0.0, %v522
        %v524 = vpop.f32.mrf.mxu0
        %525 = vdwg.mxu0
        %526 = vmatpush.bf16.xpose.msra.mxu0 %v478
        %527 = vmatpush.bf16.xpose.msra.mxu0 %v474
        %528 = vmatpush.bf16.xpose.msra.mxu0 %v470
        %529 = vmatpush.bf16.xpose.msra.mxu0 %v466
        %530 = vmatpush.bf16.xpose.msra.mxu0 %v462
        %531 = vmatpush.bf16.xpose.msra.mxu0 %v458
        %532 = vmatpush.bf16.xpose.msra.mxu0 %v454
        %533 = vmatpush.bf16.xpose.msra.mxu0 %v450
        %534 = vmatmul.bf16.gmra.mxu0 %v346
        %v535 = vpop.f32.mrf.mxu0
        %v536 = vadd.f32 %v523, %v535
        %v537 = vpop.f32.mrf.mxu0
        %538 = vdwg.mxu0
        %539 = vmatpush.bf16.xpose.msra.mxu0 %v479
        %540 = vmatpush.bf16.xpose.msra.mxu0 %v475
        %541 = vmatpush.bf16.xpose.msra.mxu0 %v471
        %542 = vmatpush.bf16.xpose.msra.mxu0 %v467
        %543 = vmatpush.bf16.xpose.msra.mxu0 %v463
        %544 = vmatpush.bf16.xpose.msra.mxu0 %v459
        %545 = vmatpush.bf16.xpose.msra.mxu0 %v455
        %546 = vmatpush.bf16.xpose.msra.mxu0 %v451
        %547 = vmatmul.bf16.gmra.mxu0 %v347
        %v548 = vpop.f32.mrf.mxu0
        %v549 = vadd.f32 %v536, %v548
        %v550 = vpop.f32.mrf.mxu0
        %551 = vdwg.mxu0
        %552 = vmatpush.bf16.xpose.msra.mxu0 %v480
        %553 = vmatpush.bf16.xpose.msra.mxu0 %v476
        %554 = vmatpush.bf16.xpose.msra.mxu0 %v472
        %555 = vmatpush.bf16.xpose.msra.mxu0 %v468
        %556 = vmatpush.bf16.xpose.msra.mxu0 %v464
        %557 = vmatpush.bf16.xpose.msra.mxu0 %v460
        %558 = vmatpush.bf16.xpose.msra.mxu0 %v456
        %559 = vmatpush.bf16.xpose.msra.mxu0 %v452
        %560 = vmatmul.bf16.gmra.mxu0 %v348
        %v561 = vpop.f32.mrf.mxu0
        %v562 = vadd.f32 %v549, %v561
        %v563 = vpop.f32.mrf.mxu0
        %564 = vdwg.mxu0
        %v565 = vadd.f32 %v304, %v562
        %566 = vst [vmem:[#allocation2] sm:$0xff] %v565
        %p567 = scmp.eq.s32.totalorder %s27, 1
        // Predicated region
        $region49: #{tpu_custom_call.1} parent=35 // pred_check
          %p568 = pneg %p567
        $region50: #{tpu_custom_call.1} parent=35 // pred_check_branch
          %570 = sbr.rel (%p568) target = $region52
        $region51: #{tpu_custom_call.1} parent=35 // pred_region
          %v571 = vld [vmem:[#allocation2] sm:$0xff]
          %v572 = vrot.slane %v571, 4
          %v573 = vadd.f32 %v571, %v572
          %v574 = vrot.slane %v573, 2
          %v575 = vadd.f32 %v573, %v574
          %v576 = vrot.slane %v575, 1
          %v577 = vadd.f32 %v575, %v576
          %v578 = vmul.f32 %v577, 0.5
          %v579 = vmul.f32 %v571, %v571
          %v580 = vrot.slane %v579, 4
          %v581 = vadd.f32 %v579, %v580
          %v582 = vrot.slane %v581, 2
          %v583 = vadd.f32 %v581, %v582
          %v584 = vrot.slane %v583, 1
          %v585 = vadd.f32 %v583, %v584
          %v586 = vmul.f32 %v585, 0.5
          %v587 = vmul.f32 %v578, %v578
          %v588 = vsub.f32 %v586, %v587
          %v589 = vmax.f32 %v588, 0.0
          %v590 = vsub.f32 %v571, %v578
          %v591 = vadd.f32 %v589, 1e-05
          %v592 = vrsqrt.pop %v591
          %v593 = vmul.f32 %v592, %v591
          %v594 = vmul.f32 %v593, %v592
          %v595 = vmul.f32 0.5, %v594
          %v596 = vsub.f32 1.5, %v595
          %v597 = vmul.f32 %v592, %v596
          %vm598 = vweird.f32 %v591
          %vm599 = vweird.f32 %v592
          %vm600 = vmor %vm598, %vm599
          %v601 = vsel %vm600, %v592, %v597
          %v602 = vmul.f32 %v590, %v601
          %v603 = vld [vmem:[%s295] sm:$0x1]
          %v605 = vperm.slane %v603, 0
          %v607 = vmul.f32 %v602, %v605
          %v608 = vld [vmem:[%s298] sm:$0x1]
          %v610 = vperm.slane %v608, 0
          %v612 = vadd.f32 %v607, %v610
          %v613 = vmax.f32 %v612, 0.0
          %614 = vst [vmem:[#allocation8] sm:$0xff] %v613
        $region52: #{tpu_custom_call.1} parent=35 // pred_fallthru
          _
        // Predicated region
        $region53: #{tpu_custom_call.1} parent=35 // pred_check
          %p615 = pneg %p158
        $region54: #{tpu_custom_call.1} parent=35 // pred_check_branch
          %617 = sbr.rel (%p615) target = $region56
        $region55: #{tpu_custom_call.1} parent=35 // pred_region
          %619 = vsyncadd [#allocation5], 0
          %s620 = smul.addr %s26, 8
          %s621 = scalar_lea.hbm %s4, %s620
          %s623 = sshll.u32 [#allocation8], 4
          %s624 = int_to_ptr.vmem [resolvable:$true] %s623
          %s625 = sshll.u32 %s621, 4
          %s626 = int_to_ptr.hbm [resolvable:$true] %s625
          %628 = dma.vmem_to_hbm [thread:$0]  %s624, 128, %s626, [#allocation5]
        $region56: #{tpu_custom_call.1} parent=35 // pred_fallthru
          _
        // Predicated region
        $region57: #{tpu_custom_call.1} parent=35 // pred_check
          %p629 = pneg %p158
        $region58: #{tpu_custom_call.1} parent=35 // pred_check_branch
          %631 = sbr.rel (%p629) target = $region60
        $region59: #{tpu_custom_call.1} parent=35 // pred_region
          %633 = dma.done [#allocation5], 128
        $region60: #{tpu_custom_call.1} parent=35 // pred_fallthru
          _
      $region36: #{tpu_custom_call.1} parent=5 // pred_fallthru
        _
      %p634 = scmp.le.s32.totalorder 2, %s17
      // Predicated region
      $region61: #{tpu_custom_call.1} parent=5 // pred_check
        %p635 = pneg %p634
      $region62: #{tpu_custom_call.1} parent=5 // pred_check_branch
        %637 = sbr.rel (%p635) target = $region64
      $region63: #{tpu_custom_call.1} parent=5 // pred_region
        %s638 = ssub.s32 %s17, 2
      $region64: #{tpu_custom_call.1} parent=5 // pred_fallthru
        _
    $region6: #{tpu_custom_call.1} parent=1 // loop_footer
      %s21 = sadd.s32 1, %s17
    $region7: #{tpu_custom_call.1} parent=1 // loop_footer_branch
      %16 = sbr.rel target = $region3
    $region8: #{tpu_custom_call.1} parent=1 // loop_exit
      _
    %639 = vsyncpa [#allocation4], 1
    %s640 = scalar_lea.sflag [#allocation4], 1
    %641 = vsyncpa %s640, 1
    %642 = vsyncpa [#allocation7], 1
    %s643 = scalar_lea.sflag [#allocation7], 1
    %644 = vsyncpa %s643, 1
    %645 = vsyncpa [#allocation5], 1
    %s646 = scalar_lea.sflag [#allocation5], 1
    %647 = vsyncpa %s646, 1

</llo_original>
